<compile_context>
chip_gen: v5e
topology: v5e:2x2
jax: 0.10.0
libtpu: 0.0.40
codegen_flags: <defaults>
</compile_context>

<pallas_src>
import math
from functools import partial

import jax
import jax.numpy as jnp
from jax import lax
from jax.experimental import pallas as pl
from jax.experimental.pallas import tpu as pltpu


def make_positional_table(max_len: int, d_model: int) -> jnp.ndarray:
    """Replicates the PyTorch buffer `pe` (without the singleton middle axis)."""
    position = jnp.arange(max_len, dtype=jnp.float32)[:, None]              # (L, 1)
    div_term = jnp.exp(
        jnp.arange(0, d_model, 2, dtype=jnp.float32) * (-math.log(10000.0) / d_model)
    )                                                                       # (D/2,)
    pe = jnp.zeros((max_len, d_model), dtype=jnp.float32)
    pe = pe.at[:, 0::2].set(jnp.sin(position * div_term))
    pe = pe.at[:, 1::2].set(jnp.cos(position * div_term))
    return pe                                                               # (L, D)


def _pos_enc_kernel(seed_ref, x_ref, pe_ref, o_ref, *, p: float):
    # x_ref : (TS, B, D) VMEM tile of the input
    # pe_ref: (TS, D)    VMEM tile of the positional table (same rows as x)
    # seed_ref: scalar-prefetch (1,) int32 in SMEM
    x = x_ref[...]
    pe = pe_ref[...].astype(x.dtype)
    y = x + pe[:, None, :]                                   # broadcast over batch

    if p > 0.0:
        TS, B, D = x_ref.shape
        # Global flat element index -> unique counter per element across all tiles.
        row0 = pl.program_id(0) * TS
        s_idx = lax.broadcasted_iota(jnp.int32, (TS, B, D), 0) + row0
        b_idx = lax.broadcasted_iota(jnp.int32, (TS, B, D), 1)
        d_idx = lax.broadcasted_iota(jnp.int32, (TS, B, D), 2)
        ctr = (s_idx * (B * D) + b_idx * D + d_idx).astype(jnp.uint32)

        # Counter-based hash PRNG (lowbias32 mixer) — plain VPU int ops, so it
        # lowers on TPU *and* in interpret mode (the HW PRNG primitive does not).
        h = ctr ^ seed_ref[0].astype(jnp.uint32)
        h = (h ^ (h >> jnp.uint32(16))) * jnp.uint32(0x7FEB352D)
        h = (h ^ (h >> jnp.uint32(15))) * jnp.uint32(0x846CA68B)
        h = h ^ (h >> jnp.uint32(16))

        # Integer-threshold keep test on the raw bits: keep with prob (1 - p).
        bits31 = (h >> jnp.uint32(1)).astype(jnp.int32)       # uniform in [0, 2^31)
        thresh = jnp.int32(int(round(p * float(1 << 31))))
        keep = bits31 >= thresh

        scale = jnp.asarray(1.0 / (1.0 - p), dtype=y.dtype)   # inverted dropout
        y = jnp.where(keep, y * scale, jnp.zeros_like(y))

    o_ref[...] = y.astype(o_ref.dtype)


def positional_encoding(x: jnp.ndarray, pe_table: jnp.ndarray, seed,
                        p: float = 0.1, block_rows: int | None = None) -> jnp.ndarray:
    """Forward pass of PositionalEncoding: dropout(x + pe[:S], p)."""
    S, B, D = x.shape
    L, D2 = pe_table.shape
    assert D2 == D and L >= S, "pe_table must be (max_len >= S, d_model)"

    # Tile the sequence axis.  Budget ~2 MiB per x block -> (x + out) * 2 bufs +
    # pe tile stays well inside v5e's 16 MiB default scoped VMEM and far below
    # v7x's 64 MiB physical VMEM, while still amortizing per-step overhead.
    if block_rows is None:
        bytes_per_row = B * D * x.dtype.itemsize
        target_bytes = 2 * 1024 * 1024
        block_rows = max(8, (target_bytes // max(bytes_per_row, 1)) // 8 * 8)
    block_rows = min(block_rows, max(8, (S // 8) * 8 if S >= 8 else 8))
    TS = block_rows
    grid = (pl.cdiv(S, TS),)

    seed_arr = jnp.asarray(seed, dtype=jnp.int32).reshape((1,))
    kernel = partial(_pos_enc_kernel, p=float(p))

    return pl.pallas_call(
        kernel,
        out_shape=jax.ShapeDtypeStruct((S, B, D), x.dtype),
        grid_spec=pltpu.PrefetchScalarGridSpec(
            num_scalar_prefetch=1,                       # seed lands in SMEM
            grid=grid,
            in_specs=[
                pl.BlockSpec((TS, B, D), lambda i, seed: (i, 0, 0)),   # x tile
                pl.BlockSpec((TS, D),    lambda i, seed: (i, 0)),      # pe rows for tile
            ],
            out_specs=pl.BlockSpec((TS, B, D), lambda i, seed: (i, 0, 0)),
        ),
        compiler_params=pltpu.CompilerParams(
            dimension_semantics=("parallel",),           # shard tiles across v7x TCs
        ),
    )(seed_arr, x, pe_table)


if __name__ == "__main__":
    d_model = 128          # lane-dense last dim (realistic transformer width)
    max_len = 64           # small stand-in for 5000 (only pe[:S] is ever touched)
    seq_len = 16
    batch = 4
    dropout_p = 0.1

    key = jax.random.PRNGKey(0)
    x = jax.random.normal(key, (seq_len, batch, d_model), dtype=jnp.float32)
    pe_table = make_positional_table(max_len, d_model)
    ref = x + pe_table[:seq_len][:, None, :]

    # 1) Eval path (p=0): must equal x + pe exactly.  block_rows=8 -> grid of 2
    #    tiles to exercise the pipelined / tiled path.
    y_nodrop = jax.block_until_ready(
        positional_encoding(x, pe_table, seed=0, p=0.0, block_rows=8))
    assert jnp.allclose(y_nodrop, ref, atol=1e-6), "add-PE path mismatch"

    # 2) Training path (dropout active, deterministic seed).
    y = jax.block_until_ready(
        positional_encoding(x, pe_table, seed=1234, p=dropout_p, block_rows=8))
    assert y.shape == (seq_len, batch, d_model)

    # Every output element is either dropped (0) or kept-and-scaled by 1/(1-p).
    scaled = ref / (1.0 - dropout_p)
    ok = jnp.isclose(y, 0.0, atol=1e-6) | jnp.isclose(y, scaled, atol=1e-4, rtol=1e-4)
    assert bool(jnp.all(ok)), "dropout output is neither 0 nor scaled keep"
    keep_frac = float(jnp.mean(jnp.abs(y) > 1e-6))
    assert 0.80 <= keep_frac <= 0.97, f"keep fraction {keep_frac} far from 1-p"

    print("KERNEL_OK")
</pallas_src>

<mosaic_0001>
module attributes {stable_mosaic.version = 11 : i64} {
  func.func @_pos_enc_kernel(%arg0: i32, %arg1: memref<1xi32, #tpu.memory_space<smem>>, %arg2: memref<8x4x128xf32, #tpu.memory_space<vmem>>, %arg3: memref<8x128xf32, #tpu.memory_space<vmem>>, %arg4: memref<8x4x128xf32, #tpu.memory_space<vmem>>) attributes {dimension_semantics = [#tpu.dimension_semantics<parallel>], iteration_bounds = array<i64: 2>, scalar_prefetch = 1 : i64, scratch_operands = 0 : i64, tpu.core_type = #tpu.core_type<tc>, window_params = [{transform_indices = @transform_0, window_bounds = array<i64: 8, 4, 128>}, {transform_indices = @transform_1, window_bounds = array<i64: 8, 128>}, {transform_indices = @transform_2, window_bounds = array<i64: 8, 4, 128>}]} {
    %c0 = arith.constant 0 : index
    %c0_0 = arith.constant 0 : index
    %c0_1 = arith.constant 0 : index
    %0 = vector.load %arg2[%c0, %c0_0, %c0_1] : memref<8x4x128xf32, #tpu.memory_space<vmem>>, vector<8x4x128xf32>
    %c0_2 = arith.constant 0 : index
    %c0_3 = arith.constant 0 : index
    %1 = vector.load %arg3[%c0_2, %c0_3] : memref<8x128xf32, #tpu.memory_space<vmem>>, vector<8x128xf32>
    %2 = vector.shape_cast %1 : vector<8x128xf32> to vector<8x1x128xf32>
    %3 = vector.broadcast %2 : vector<8x1x128xf32> to vector<8x4x128xf32>
    %4 = arith.addf %0, %3 : vector<8x4x128xf32>
    %c0_4 = arith.constant 0 : index
    %c0_5 = arith.constant 0 : index
    %c0_6 = arith.constant 0 : index
    %5 = vector.load %arg4[%c0_4, %c0_5, %c0_6] : memref<8x4x128xf32, #tpu.memory_space<vmem>>, vector<8x4x128xf32>
    tpu.vector_store %arg4[%c0_4, %c0_5, %c0_6], %4 {strides = array<i32>} : memref<8x4x128xf32, #tpu.memory_space<vmem>>, vector<8x4x128xf32>,
    return
  }
  func.func @transform_0(%arg0: i32, %arg1: memref<1xi32, #tpu.memory_space<smem>>) -> (i32, i32, i32) {
    %c0_i32 = arith.constant 0 : i32
    %c0_i32_0 = arith.constant 0 : i32
    %c0_i32_1 = arith.constant 0 : i32
    return %arg0, %c0_i32, %c0_i32_0 : i32, i32, i32
  }
  func.func @transform_1(%arg0: i32, %arg1: memref<1xi32, #tpu.memory_space<smem>>) -> (i32, i32) {
    %c0_i32 = arith.constant 0 : i32
    %c0_i32_0 = arith.constant 0 : i32
    return %arg0, %c0_i32 : i32, i32
  }
  func.func @transform_2(%arg0: i32, %arg1: memref<1xi32, #tpu.memory_space<smem>>) -> (i32, i32, i32) {
    %c0_i32 = arith.constant 0 : i32
    %c0_i32_0 = arith.constant 0 : i32
    %c0_i32_1 = arith.constant 0 : i32
    return %arg0, %c0_i32, %c0_i32_0 : i32, i32, i32
  }
}

</mosaic_0001>

<llo_original>
// kernel: tpu_custom_call.1
$region0: #{tpu_custom_call.1}
  #allocation0 [shape = 'u32[]', space=smem, size = 0x4, offset = 0x4, fixed_abs, tag = 'smem constant byte address 0x4 - core index']
  #allocation1 [shape = 'u32[72,128]{1,0:T(1,128)}', space=vmem, size = 0x9000, scoped, tag = 'internal scratch']
  #allocation2 [shape = 's32[1]{0}', space=sflag, size = 0x4, scoped, tag = 'scoped memory for tpu_custom_call.1']
  #allocation3 [shape = 's32[1]{0:T(128)S(6)}', space=smem, size = 0x200, scoped, tag = 'prefetched SMEM operand 0']
  %s0 = inlined_call_operand.<no memory space> [shape: s32[1], index: 0, kind: input, shape index: {}]
  %s1 = inlined_call_operand.hbm [shape: f32[16,4,128], index: 1, kind: input, shape index: {}]
  %s2 = inlined_call_operand.hbm [shape: f32[64,128], index: 2, kind: input, shape index: {}]
  %s3 = inlined_call_operand.hbm [shape: f32[16,4,128], index: 3, kind: output, shape index: {}]
  %s4 = sld [smem:[#allocation0]]
  $region49: #{tpu_custom_call.1} parent=0
    _
  %s6 = ssub.s32 1, %s4
  %s7 = scalar_select 0, %s6, %s4
  %8 = sst [smem:[#allocation3]] %s0
  $region1: #{tpu_custom_call.1} parent=0
    #allocation4 [shape = 'u8[32768]{0}', space=vmem, size = 0x8000, scoped, tag = 'input window, operand 1']
    #allocation5 [shape = 's32[2]{0}', space=sflag, size = 0x8, scoped, tag = 'scoped memory for tpu_custom_call.1']
    #allocation6 [shape = 's32[2]{0}', space=sflag, size = 0x8, scoped, tag = 'scoped memory for tpu_custom_call.1']
    #allocation7 [shape = 'u8[8192]{0}', space=vmem, size = 0x2000, scoped, tag = 'input window, operand 2']
    #allocation8 [shape = 's32[2]{0}', space=sflag, size = 0x8, scoped, tag = 'scoped memory for tpu_custom_call.1']
    #allocation9 [shape = 'u8[32768]{0}', space=vmem, size = 0x8000, scoped, tag = 'output window, operand 0']
    %9 = vsyncpa [#allocation5], 0
    %s10 = scalar_lea.sflag [#allocation5], 1
    %11 = vsyncpa %s10, 0
    %12 = vsyncpa [#allocation8], 0
    %s13 = scalar_lea.sflag [#allocation8], 1
    %14 = vsyncpa %s13, 0
    %15 = vsyncpa [#allocation6], 0
    %s16 = scalar_lea.sflag [#allocation6], 1
    %17 = vsyncpa %s16, 0
    loop: start=0, step=1, limit=4
    $region2: #{tpu_custom_call.1} parent=1 // loop_pre_header
      _
    $region3: #{tpu_custom_call.1} parent=1 // loop_header
      %s19 = sphi 0, %s23
      %p20 = scmp.ge.s32.totalorder %s19, 4
      %s29 = sphi 0, %s31
      %s32 = sphi 0, %s29
      %s33 = sphi 0, %s32
      %s49 = sphi 0, %s33
      %s55 = sphi 0, %s57
      %s58 = sphi 0, %s55
      %s59 = sphi 0, %s58
      %s75 = sphi 0, %s59
      %s81 = sphi 0, %s83
      %s84 = sphi 0, %s81
      %s85 = sphi 0, %s84
      %s101 = sphi 0, %s85
    $region4: #{tpu_custom_call.1} parent=1 // loop_header_branch
      %22 = sbr.rel (%p20) target = $region8
    $region5: #{tpu_custom_call.1} parent=1 // loop_body
      %s24 = ssub.s32 %s19, 1
      %s25 = ssub.s32 %s19, 2
      %s26 = sadd.s32 %s19, 1
      %s27 = ssub.s32 %s19, %s26
      %p28 = scmp.eq.s32.totalorder %s27, 0
      %s30 = sadd.s32 %s29, 1
      %s31 = scalar_select %p28, %s29, %s30
      %p34 = pneg %p28
      %p35 = scmp.eq.s32.totalorder %s19, 1
      %p36 = por %p34, %p35
      %p37 = scmp.ne.s32.totalorder %s29, %s32
      %p38 = scmp.eq.s32.totalorder %s19, 0
      %p39 = por %p37, %p38
      %p40 = scmp.ne.s32.totalorder %s29, %s32
      %p41 = scmp.eq.s32.totalorder %s24, 1
      %p42 = por %p40, %p41
      %p43 = scmp.ne.s32.totalorder %s32, %s33
      %p44 = scmp.eq.s32.totalorder %s24, 0
      %p45 = por %p43, %p44
      %p46 = scmp.ne.s32.totalorder %s32, %s33
      %p47 = scmp.eq.s32.totalorder %s25, 1
      %p48 = por %p46, %p47
      %p50 = scmp.ne.s32.totalorder %s33, %s49
      %p51 = scmp.eq.s32.totalorder %s25, 0
      %p52 = por %p50, %p51
      %s53 = ssub.s32 %s19, %s26
      %p54 = scmp.eq.s32.totalorder %s53, 0
      %s56 = sadd.s32 %s55, 1
      %s57 = scalar_select %p54, %s55, %s56
      %p60 = pneg %p54
      %p61 = scmp.eq.s32.totalorder %s19, 1
      %p62 = por %p60, %p61
      %p63 = scmp.ne.s32.totalorder %s55, %s58
      %p64 = scmp.eq.s32.totalorder %s19, 0
      %p65 = por %p63, %p64
      %p66 = scmp.ne.s32.totalorder %s55, %s58
      %p67 = scmp.eq.s32.totalorder %s24, 1
      %p68 = por %p66, %p67
      %p69 = scmp.ne.s32.totalorder %s58, %s59
      %p70 = scmp.eq.s32.totalorder %s24, 0
      %p71 = por %p69, %p70
      %p72 = scmp.ne.s32.totalorder %s58, %s59
      %p73 = scmp.eq.s32.totalorder %s25, 1
      %p74 = por %p72, %p73
      %p76 = scmp.ne.s32.totalorder %s59, %s75
      %p77 = scmp.eq.s32.totalorder %s25, 0
      %p78 = por %p76, %p77
      %s79 = ssub.s32 %s19, %s26
      %p80 = scmp.eq.s32.totalorder %s79, 0
      %s82 = sadd.s32 %s81, 1
      %s83 = scalar_select %p80, %s81, %s82
      %p86 = pneg %p80
      %p87 = scmp.eq.s32.totalorder %s19, 1
      %p88 = por %p86, %p87
      %p89 = scmp.ne.s32.totalorder %s81, %s84
      %p90 = scmp.eq.s32.totalorder %s19, 0
      %p91 = por %p89, %p90
      %p92 = scmp.ne.s32.totalorder %s81, %s84
      %p93 = scmp.eq.s32.totalorder %s24, 1
      %p94 = por %p92, %p93
      %p95 = scmp.ne.s32.totalorder %s84, %s85
      %p96 = scmp.eq.s32.totalorder %s24, 0
      %p97 = por %p95, %p96
      %p98 = scmp.ne.s32.totalorder %s84, %s85
      %p99 = scmp.eq.s32.totalorder %s25, 1
      %p100 = por %p98, %p99
      %p102 = scmp.ne.s32.totalorder %s85, %s101
      %p103 = scmp.eq.s32.totalorder %s25, 0
      %p104 = por %p102, %p103
      %p105 = scmp.le.s32.totalorder 1, %s19
      %p106 = scmp.lt.s32.totalorder %s19, 3
      %p107 = pnand %p105, %p106
      %p108 = pneg %p107
      // Predicated region
      $region9: #{tpu_custom_call.1} parent=5 // pred_check
        _
      $region10: #{tpu_custom_call.1} parent=5 // pred_check_branch
        %110 = sbr.rel (%p107) target = $region12
      $region11: #{tpu_custom_call.1} parent=5 // pred_region
        %s111 = ssub.s32 %s19, 1
      $region12: #{tpu_custom_call.1} parent=5 // pred_fallthru
        _
      %p112 = scmp.lt.s32.totalorder %s19, 2
      // Predicated region
      $region13: #{tpu_custom_call.1} parent=5 // pred_check
        %p113 = pneg %p112
      $region14: #{tpu_custom_call.1} parent=5 // pred_check_branch
        %115 = sbr.rel (%p113) target = $region16
      $region15: #{tpu_custom_call.1} parent=5 // pred_region
        // Predicated region
        $region17: #{tpu_custom_call.1} parent=15 // pred_check
          %p116 = pneg %p39
        $region18: #{tpu_custom_call.1} parent=15 // pred_check_branch
          %118 = sbr.rel (%p116) target = $region20
        $region19: #{tpu_custom_call.1} parent=15 // pred_region
          %s119 = sand.u32 %s29, 1
          %s120 = scalar_lea.sflag [#allocation5], %s119
          %s121 = sand.u32 %s29, 1
          %s122 = smul.addr %s121, 32
          %s123 = scalar_lea.vmem [#allocation4], %s122
          %s124 = smul.u32 8, %s19
          %126 = vsyncadd %s120, 0
          %s127 = smul.addr %s124, 4
          %s128 = scalar_lea.hbm %s1, %s127
          %s129 = sshll.u32 %s128, 4
          %s130 = int_to_ptr.hbm [resolvable:$true] %s129
          %s131 = sshll.u32 %s123, 4
          %s132 = int_to_ptr.vmem [resolvable:$true] %s131
          %137 = dma.hbm_to_vmem [thread:$0]  %s130, 512, %s132, %s120, 64, 64, 4
        $region20: #{tpu_custom_call.1} parent=15 // pred_fallthru
          _
        // Predicated region
        $region21: #{tpu_custom_call.1} parent=15 // pred_check
          %p138 = pneg %p65
        $region22: #{tpu_custom_call.1} parent=15 // pred_check_branch
          %140 = sbr.rel (%p138) target = $region24
        $region23: #{tpu_custom_call.1} parent=15 // pred_region
          %s141 = sand.u32 %s55, 1
          %s142 = scalar_lea.sflag [#allocation8], %s141
          %s143 = sand.u32 %s55, 1
          %s144 = smul.addr %s143, 8
          %s145 = scalar_lea.vmem [#allocation7], %s144
          %147 = vsyncadd %s142, 0
          %s148 = smul.addr %s19, 8
          %s149 = scalar_lea.hbm %s2, %s148
          %s151 = sshll.u32 %s149, 4
          %s152 = int_to_ptr.hbm [resolvable:$true] %s151
          %s153 = sshll.u32 %s145, 4
          %s154 = int_to_ptr.vmem [resolvable:$true] %s153
          %156 = dma.hbm_to_vmem [thread:$0]  %s152, 128, %s154, %s142
        $region24: #{tpu_custom_call.1} parent=15 // pred_fallthru
          _
      $region16: #{tpu_custom_call.1} parent=5 // pred_fallthru
        _
      %p157 = scmp.le.s32.totalorder 1, %s19
      %p158 = scmp.lt.s32.totalorder %s19, 3
      %p159 = pnand %p157, %p158
      %p160 = pneg %p159
      // Predicated region
      $region25: #{tpu_custom_call.1} parent=5 // pred_check
        _
      $region26: #{tpu_custom_call.1} parent=5 // pred_check_branch
        %162 = sbr.rel (%p159) target = $region28
      $region27: #{tpu_custom_call.1} parent=5 // pred_region
        %s163 = ssub.s32 %s19, 1
        %s164 = sand.u32 %s32, 1
        %s165 = scalar_lea.sflag [#allocation5], %s164
        %s166 = sand.u32 %s32, 1
        %s167 = smul.addr %s166, 32
        %s168 = scalar_lea.vmem [#allocation4], %s167
        // Predicated region
        $region29: #{tpu_custom_call.1} parent=27 // pred_check
          %p169 = pneg %p45
        $region30: #{tpu_custom_call.1} parent=27 // pred_check_branch
          %171 = sbr.rel (%p169) target = $region32
        $region31: #{tpu_custom_call.1} parent=27 // pred_region
          %173 = dma.done %s165, 512
        $region32: #{tpu_custom_call.1} parent=27 // pred_fallthru
          _
        %s174 = sand.u32 %s58, 1
        %s175 = scalar_lea.sflag [#allocation8], %s174
        %s176 = sand.u32 %s58, 1
        %s177 = smul.addr %s176, 8
        %s178 = scalar_lea.vmem [#allocation7], %s177
        // Predicated region
        $region33: #{tpu_custom_call.1} parent=27 // pred_check
          %p179 = pneg %p71
        $region34: #{tpu_custom_call.1} parent=27 // pred_check_branch
          %181 = sbr.rel (%p179) target = $region36
        $region35: #{tpu_custom_call.1} parent=27 // pred_region
          %183 = dma.done %s175, 128
        $region36: #{tpu_custom_call.1} parent=27 // pred_fallthru
          _
        %s184 = sand.u32 %s32, 1
        %s185 = scalar_lea.sflag [#allocation5], %s184
        %s186 = sand.u32 %s32, 1
        %s187 = smul.addr %s186, 32
        %s188 = scalar_lea.vmem [#allocation4], %s187
        %p189 = pneg %p45
        %p190 = pneg %p42
        %s191 = sand.u32 %s58, 1
        %s192 = scalar_lea.sflag [#allocation8], %s191
        %s193 = sand.u32 %s58, 1
        %s194 = smul.addr %s193, 8
        %s195 = scalar_lea.vmem [#allocation7], %s194
        %p196 = pneg %p71
        %p197 = pneg %p68
        %p198 = pneg %p97
        %p199 = pneg %p94
        %s200 = sand.u32 %s84, 1
        %s201 = scalar_lea.sflag [#allocation6], %s200
        %s202 = sand.u32 %s84, 1
        %s203 = smul.addr %s202, 32
        %s204 = scalar_lea.vmem [#allocation9], %s203
        %s205 = smul.u32 8, %s24
        %s206 = smul.u32 8, %s24
        %v207 = vld [vmem:[%s168] sm:$0xf]
        %v208 = vld [vmem:[%s168 + $0x4] sm:$0xf]
        %v209 = vld [vmem:[%s168 + $0x8] sm:$0xf]
        %v210 = vld [vmem:[%s168 + $0xc] sm:$0xf]
        %v211 = vld [vmem:[%s168 + $0x10] sm:$0xf]
        %v212 = vld [vmem:[%s168 + $0x14] sm:$0xf]
        %v213 = vld [vmem:[%s168 + $0x18] sm:$0xf]
        %v214 = vld [vmem:[%s168 + $0x1c] sm:$0xf]
        %v215 = vld [vmem:[%s178] sm:$0xff]
        %v217 = vrot.slane %v215, 1
        %v218 = vrot.slane %v215, 2
        %v219 = vrot.slane %v215, 3
        %v220 = vrot.slane %v215, 4
        %v221 = vrot.slane %v215, 5
        %v222 = vrot.slane %v215, 6
        %v223 = vrot.slane %v215, 7
        %v224 = vperm.slane %v215, 0
        %v225 = vperm.slane %v217, 0
        %v226 = vperm.slane %v218, 0
        %v227 = vperm.slane %v219, 0
        %v228 = vperm.slane %v220, 0
        %v229 = vperm.slane %v221, 0
        %v230 = vperm.slane %v222, 0
        %v231 = vperm.slane %v223, 0
        %v240 = vadd.f32 %v207, %v224
        %v241 = vadd.f32 %v208, %v225
        %v242 = vadd.f32 %v209, %v226
        %v243 = vadd.f32 %v210, %v227
        %v244 = vadd.f32 %v211, %v228
        %v245 = vadd.f32 %v212, %v229
        %v246 = vadd.f32 %v213, %v230
        %v247 = vadd.f32 %v214, %v231
        %248 = vst [vmem:[%s204] sm:$0xf] %v240
        %249 = vst [vmem:[%s204 + $0x4] sm:$0xf] %v241
        %250 = vst [vmem:[%s204 + $0x8] sm:$0xf] %v242
        %251 = vst [vmem:[%s204 + $0xc] sm:$0xf] %v243
        %252 = vst [vmem:[%s204 + $0x10] sm:$0xf] %v244
        %253 = vst [vmem:[%s204 + $0x14] sm:$0xf] %v245
        %254 = vst [vmem:[%s204 + $0x18] sm:$0xf] %v246
        %255 = vst [vmem:[%s204 + $0x1c] sm:$0xf] %v247
        %s256 = sand.u32 %s84, 1
        %s257 = scalar_lea.sflag [#allocation6], %s256
        %s258 = sand.u32 %s84, 1
        %s259 = smul.addr %s258, 32
        %s260 = scalar_lea.vmem [#allocation9], %s259
        // Predicated region
        $region37: #{tpu_custom_call.1} parent=27 // pred_check
          %p261 = pneg %p94
        $region38: #{tpu_custom_call.1} parent=27 // pred_check_branch
          %263 = sbr.rel (%p261) target = $region40
        $region39: #{tpu_custom_call.1} parent=27 // pred_region
          %s264 = smul.u32 8, %s24
          %266 = vsyncadd %s257, 0
          %s267 = smul.addr %s264, 4
          %s268 = scalar_lea.hbm %s3, %s267
          %s269 = sshll.u32 %s260, 4
          %s270 = int_to_ptr.vmem [resolvable:$true] %s269
          %s271 = sshll.u32 %s268, 4
          %s272 = int_to_ptr.hbm [resolvable:$true] %s271
          %277 = dma.vmem_to_hbm [thread:$0]  %s270, 512, %s272, %s257, 64, 64, 4
        $region40: #{tpu_custom_call.1} parent=27 // pred_fallthru
          _
      $region28: #{tpu_custom_call.1} parent=5 // pred_fallthru
        _
      %p278 = scmp.le.s32.totalorder 2, %s19
      // Predicated region
      $region41: #{tpu_custom_call.1} parent=5 // pred_check
        %p279 = pneg %p278
      $region42: #{tpu_custom_call.1} parent=5 // pred_check_branch
        %281 = sbr.rel (%p279) target = $region44
      $region43: #{tpu_custom_call.1} parent=5 // pred_region
        %s282 = ssub.s32 %s19, 2
        // Predicated region
        $region45: #{tpu_custom_call.1} parent=43 // pred_check
          %p283 = pneg %p100
        $region46: #{tpu_custom_call.1} parent=43 // pred_check_branch
          %285 = sbr.rel (%p283) target = $region48
        $region47: #{tpu_custom_call.1} parent=43 // pred_region
          %s286 = sand.u32 %s85, 1
          %s287 = scalar_lea.sflag [#allocation6], %s286
          %s288 = sand.u32 %s85, 1
          %s289 = smul.addr %s288, 32
          %s290 = scalar_lea.vmem [#allocation9], %s289
          %292 = dma.done %s287, 512
        $region48: #{tpu_custom_call.1} parent=43 // pred_fallthru
          _
      $region44: #{tpu_custom_call.1} parent=5 // pred_fallthru
        _
    $region6: #{tpu_custom_call.1} parent=1 // loop_footer
      %s23 = sadd.s32 1, %s19
    $region7: #{tpu_custom_call.1} parent=1 // loop_footer_branch
      %18 = sbr.rel target = $region3
    $region8: #{tpu_custom_call.1} parent=1 // loop_exit
      _
    %293 = vsyncpa [#allocation5], 1
    %s294 = scalar_lea.sflag [#allocation5], 1
    %295 = vsyncpa %s294, 1
    %296 = vsyncpa [#allocation8], 1
    %s297 = scalar_lea.sflag [#allocation8], 1
    %298 = vsyncpa %s297, 1
    %299 = vsyncpa [#allocation6], 1
    %s300 = scalar_lea.sflag [#allocation6], 1
    %301 = vsyncpa %s300, 1

</llo_original>
